<compile_context>
chip_gen: v5e
topology: v5e:2x2
jax: 0.10.0
libtpu: 0.0.40
codegen_flags: <defaults>
</compile_context>

<pallas_src>
import jax
import jax.numpy as jnp
from jax.experimental import pallas as pl
from jax.experimental.pallas import tpu as pltpu


def gmf_kernel(ue_ref, ie_ref,    # (F, TB) gathered embeddings (F = sublanes, batch = lanes)
               w_ref,             # (F, 1) affine weight column (resident)
               b_ref,             # (1, 1) bias in SMEM
               o_ref):            # (1, TB) lane-dense output tile
    prod = ue_ref[...] * ie_ref[...]                       # (F, TB)  VPU elementwise
    weighted = prod * w_ref[...]                           # lane-broadcast of (F, 1)
    logit = jnp.sum(weighted, axis=0, keepdims=True)       # (1, TB)  sublane reduce (XLU)
    logit = logit + b_ref[0, 0]                            # scalar bias from SMEM
    o_ref[...] = jax.nn.sigmoid(logit)                     # logistic


def gmf_forward(user_indices, item_indices, user_table, item_table, weight, bias,
                *, max_tb=512):
    """Pallas GMF forward.

    user_indices, item_indices : int32 (B,)
    user_table                 : f32 (num_users, F)
    item_table                 : f32 (num_items, F)
    weight                     : f32 (1, F)   (nn.Linear(F, 1).weight)
    bias                       : f32 (1, 1)   (nn.Linear(F, 1).bias)
    returns                    : f32 (B, 1)
    """
    B = user_indices.shape[0]
    F = user_table.shape[1]

    # Gather in the wrapper (tables are a few KB); present (F, B) so the kernel tile
    # has batch on the lane axis (lane-dense output, sublane reduction over F).
    ue_t = jnp.take(user_table, user_indices, axis=0).astype(jnp.float32).T   # (F, B)
    ie_t = jnp.take(item_table, item_indices, axis=0).astype(jnp.float32).T   # (F, B)
    # TODO(synk): for production-sized tables that don't fit VMEM, switch to a
    # scalar-prefetch / manual-DMA batched gather path instead of the wrapper gather.

    # Pad batch to a lane-aligned tile size (multiple of 128).
    b_pad = max(128, -(-B // 128) * 128)
    tb = min(max_tb, b_pad)
    b_pad = -(-b_pad // tb) * tb
    if b_pad != B:
        ue_t = jnp.pad(ue_t, ((0, 0), (0, b_pad - B)))
        ie_t = jnp.pad(ie_t, ((0, 0), (0, b_pad - B)))

    w_col = weight.reshape(F, 1).astype(jnp.float32)       # (F, 1)
    b_smem = bias.reshape(1, 1).astype(jnp.float32)        # (1, 1) -> SMEM

    grid_spec = pltpu.PrefetchScalarGridSpec(
        num_scalar_prefetch=0,
        grid=(b_pad // tb,),
        in_specs=[
            pl.BlockSpec((F, tb), lambda b: (0, b)),                      # user emb tile
            pl.BlockSpec((F, tb), lambda b: (0, b)),                      # item emb tile
            pl.BlockSpec((F, 1), lambda b: (0, 0)),                       # weight (resident)
            pl.BlockSpec(memory_space=pltpu.MemorySpace.SMEM),            # bias (SMEM)
        ],
        out_specs=pl.BlockSpec((1, tb), lambda b: (0, b)),                # lane-dense output
    )

    out = pl.pallas_call(
        gmf_kernel,
        out_shape=jax.ShapeDtypeStruct((1, b_pad), jnp.float32),
        grid_spec=grid_spec,
        compiler_params=pltpu.CompilerParams(
            dimension_semantics=("parallel",)),
    )(ue_t, ie_t, w_col, b_smem)

    return out[0, :B].reshape(B, 1)


def gmf_reference(user_indices, item_indices, user_table, item_table, weight, bias):
    ue = user_table[user_indices]
    ie = item_table[item_indices]
    logits = (ue * ie) @ weight.T + bias[0]
    return jax.nn.sigmoid(logits)


if __name__ == "__main__":
    # Small, deterministic synthetic config (mirrors module __init__ shapes).
    num_users = 50
    num_items = 60
    factor_num = 32          # args.factor_num
    batch = 8

    key = jax.random.PRNGKey(0)
    k_ue, k_ie, k_w, k_b, k_u, k_i = jax.random.split(key, 6)

    # nn.Embedding default init: N(0, 1)
    user_table = jax.random.normal(k_ue, (num_users, factor_num), dtype=jnp.float32)
    item_table = jax.random.normal(k_ie, (num_items, factor_num), dtype=jnp.float32)

    # nn.Linear(F, 1) default init: U(-1/sqrt(F), 1/sqrt(F))
    bound = 1.0 / (factor_num ** 0.5)
    weight = jax.random.uniform(k_w, (1, factor_num), minval=-bound, maxval=bound,
                                dtype=jnp.float32)
    bias = jax.random.uniform(k_b, (1, 1), minval=-bound, maxval=bound,
                              dtype=jnp.float32)

    user_indices = jax.random.randint(k_u, (batch,), 0, num_users, dtype=jnp.int32)
    item_indices = jax.random.randint(k_i, (batch,), 0, num_items, dtype=jnp.int32)

    rating = gmf_forward(user_indices, item_indices, user_table, item_table, weight, bias)
    rating = jax.block_until_ready(rating)

    expected = gmf_reference(user_indices, item_indices, user_table, item_table, weight, bias)
    assert rating.shape == (batch, 1)
    assert jnp.allclose(rating, expected, atol=1e-5, rtol=1e-5), "mismatch vs reference"

    print("KERNEL_OK")
</pallas_src>

<mosaic_0001>
module attributes {stable_mosaic.version = 11 : i64} {
  func.func @gmf_kernel(%arg0: i32, %arg1: memref<32x128xf32, #tpu.memory_space<vmem>>, %arg2: memref<32x128xf32, #tpu.memory_space<vmem>>, %arg3: memref<32x1xf32, #tpu.memory_space<vmem>>, %arg4: memref<1x1xf32, #tpu.memory_space<smem>>, %arg5: memref<1x128xf32, #tpu.memory_space<vmem>>) attributes {dimension_semantics = [#tpu.dimension_semantics<parallel>], iteration_bounds = array<i64: 1>, scalar_prefetch = 0 : i64, scratch_operands = 0 : i64, tpu.core_type = #tpu.core_type<tc>, window_params = [{transform_indices = @transform_0, window_bounds = array<i64: 32, 128>}, {transform_indices = @transform_1, window_bounds = array<i64: 32, 128>}, {pipeline_mode = #tpu.pipeline_mode<synchronous>, transform_indices = @transform_2, window_bounds = array<i64: 32, 1>}, {transform_indices = @transform_3, window_bounds = array<i64: 1, 1>}, {transform_indices = @transform_4, window_bounds = array<i64: 1, 128>}]} {
    %c0 = arith.constant 0 : index
    %c0_0 = arith.constant 0 : index
    %0 = vector.load %arg1[%c0, %c0_0] : memref<32x128xf32, #tpu.memory_space<vmem>>, vector<32x128xf32>
    %c0_1 = arith.constant 0 : index
    %c0_2 = arith.constant 0 : index
    %1 = vector.load %arg2[%c0_1, %c0_2] : memref<32x128xf32, #tpu.memory_space<vmem>>, vector<32x128xf32>
    %2 = arith.mulf %0, %1 : vector<32x128xf32>
    %c0_3 = arith.constant 0 : index
    %c0_4 = arith.constant 0 : index
    %3 = vector.load %arg3[%c0_3, %c0_4] : memref<32x1xf32, #tpu.memory_space<vmem>>, vector<32x1xf32>
    %4 = vector.broadcast %3 : vector<32x1xf32> to vector<32x128xf32>
    %5 = arith.mulf %2, %4 : vector<32x128xf32>
    %cst = arith.constant dense<0.000000e+00> : vector<128xf32>
    %6 = vector.multi_reduction <add>, %5, %cst [0] : vector<32x128xf32> to vector<128xf32>
    %7 = vector.shape_cast %6 : vector<128xf32> to vector<1x128xf32>
    %c0_5 = arith.constant 0 : index
    %c0_6 = arith.constant 0 : index
    %8 = memref.load %arg4[%c0_5, %c0_6] : memref<1x1xf32, #tpu.memory_space<smem>>
    %9 = vector.broadcast %8 : f32 to vector<1x128xf32>
    %10 = arith.addf %7, %9 : vector<1x128xf32>
    %11 = arith.negf %10 : vector<1x128xf32>
    %12 = math.exp %11 : vector<1x128xf32>
    %cst_7 = arith.constant 1.000000e+00 : f32
    %13 = vector.broadcast %cst_7 : f32 to vector<1x128xf32>
    %14 = arith.addf %13, %12 : vector<1x128xf32>
    %15 = arith.divf %13, %14 : vector<1x128xf32>
    %c0_8 = arith.constant 0 : index
    %c0_9 = arith.constant 0 : index
    %16 = vector.load %arg5[%c0_8, %c0_9] : memref<1x128xf32, #tpu.memory_space<vmem>>, vector<1x128xf32>
    tpu.vector_store %arg5[%c0_8, %c0_9], %15 {strides = array<i32>} : memref<1x128xf32, #tpu.memory_space<vmem>>, vector<1x128xf32>,
    return
  }
  func.func @transform_0(%arg0: i32) -> (i32, i32) {
    %c0_i32 = arith.constant 0 : i32
    %c0_i32_0 = arith.constant 0 : i32
    return %c0_i32, %arg0 : i32, i32
  }
  func.func @transform_1(%arg0: i32) -> (i32, i32) {
    %c0_i32 = arith.constant 0 : i32
    %c0_i32_0 = arith.constant 0 : i32
    return %c0_i32, %arg0 : i32, i32
  }
  func.func @transform_2(%arg0: i32) -> (i32, i32) {
    %c0_i32 = arith.constant 0 : i32
    %c0_i32_0 = arith.constant 0 : i32
    %c0_i32_1 = arith.constant 0 : i32
    return %c0_i32, %c0_i32_0 : i32, i32
  }
  func.func @transform_3(%arg0: i32) -> (i32, i32) {
    %c0_i32 = arith.constant 0 : i32
    %c0_i32_0 = arith.constant 0 : i32
    %c0_i32_1 = arith.constant 0 : i32
    return %c0_i32, %c0_i32_0 : i32, i32
  }
  func.func @transform_4(%arg0: i32) -> (i32, i32) {
    %c0_i32 = arith.constant 0 : i32
    %c0_i32_0 = arith.constant 0 : i32
    return %c0_i32, %arg0 : i32, i32
  }
}

</mosaic_0001>

<llo_original>
// kernel: tpu_custom_call.1
$region0: #{tpu_custom_call.1}
  #allocation0 [shape = 'u32[]', space=smem, size = 0x4, offset = 0x4, fixed_abs, tag = 'smem constant byte address 0x4 - core index']
  #allocation1 [shape = 'u32[72,128]{1,0:T(1,128)}', space=vmem, size = 0x9000, scoped, tag = 'internal scratch']
  #allocation2 [shape = 'f32[1,1]{1,0:T(1,128)S(6)}', space=smem, size = 0x200, scoped, tag = 'scoped memory for tpu_custom_call.1']
  %s0 = inlined_call_operand.vmem [shape: f32[32,128], index: 0, kind: input, shape index: {}]
  %s1 = inlined_call_operand.hbm [shape: f32[32,128], index: 1, kind: input, shape index: {}]
  %s2 = inlined_call_operand.vmem [shape: f32[32,1], index: 2, kind: input, shape index: {}]
  %s3 = inlined_call_operand.<no memory space> [shape: f32[1,1], index: 3, kind: input, shape index: {}]
  %s4 = inlined_call_operand.hbm [shape: f32[1,128], index: 4, kind: output, shape index: {}]
  %s5 = sld [smem:[#allocation0]]
  $region30: #{tpu_custom_call.1} parent=0
    _
  %s7 = ssub.s32 1, %s5
  %s8 = scalar_select 0, %s7, %s5
  %9 = sst [smem:[#allocation2]] %s3
  $region1: #{tpu_custom_call.1} parent=0
    #allocation3 [shape = 'u8[16384]{0}', space=vmem, size = 0x4000, scoped, tag = 'input window, operand 1, single buffered']
    #allocation4 [shape = 's32[1]{0}', space=sflag, size = 0x4, scoped, tag = 'scoped memory for tpu_custom_call.1']
    #allocation5 [shape = 's32[1]{0}', space=sflag, size = 0x4, scoped, tag = 'scoped memory for tpu_custom_call.1']
    #allocation6 [shape = 'u8[512]{0}', space=vmem, size = 0x400, scoped, tag = 'output window, operand 0, single buffered']
    %10 = vsyncpa [#allocation4], 0
    %11 = vsyncpa [#allocation5], 0
    // Predicated region
    $region2: #{tpu_custom_call.1} parent=1 // pred_check
      _
    $region3: #{tpu_custom_call.1} parent=1 // pred_check_branch
      %13 = sbr.rel (0) target = $region5
    $region4: #{tpu_custom_call.1} parent=1 // pred_region
      _
    $region5: #{tpu_custom_call.1} parent=1 // pred_fallthru
      _
    // Predicated region
    $region6: #{tpu_custom_call.1} parent=1 // pred_check
      _
    $region7: #{tpu_custom_call.1} parent=1 // pred_check_branch
      %15 = sbr.rel (0) target = $region9
    $region8: #{tpu_custom_call.1} parent=1 // pred_region
      %17 = vsyncadd [#allocation4], 0
      %s18 = sshll.u32 %s1, 4
      %s19 = int_to_ptr.hbm [resolvable:$true] %s18
      %s20 = sshll.u32 [#allocation3], 4
      %s21 = int_to_ptr.vmem [resolvable:$true] %s20
      %26 = dma.hbm_to_vmem [thread:$0]  %s19, 512, %s21, [#allocation4], 128, 128, 8
    $region9: #{tpu_custom_call.1} parent=1 // pred_fallthru
      _
    // Predicated region
    $region10: #{tpu_custom_call.1} parent=1 // pred_check
      _
    $region11: #{tpu_custom_call.1} parent=1 // pred_check_branch
      %28 = sbr.rel (0) target = $region13
    $region12: #{tpu_custom_call.1} parent=1 // pred_region
      _
    $region13: #{tpu_custom_call.1} parent=1 // pred_fallthru
      _
    // Predicated region
    $region14: #{tpu_custom_call.1} parent=1 // pred_check
      _
    $region15: #{tpu_custom_call.1} parent=1 // pred_check_branch
      %30 = sbr.rel (0) target = $region17
    $region16: #{tpu_custom_call.1} parent=1 // pred_region
      _
    $region17: #{tpu_custom_call.1} parent=1 // pred_fallthru
      _
    // Predicated region
    $region18: #{tpu_custom_call.1} parent=1 // pred_check
      _
    $region19: #{tpu_custom_call.1} parent=1 // pred_check_branch
      %32 = sbr.rel (0) target = $region21
    $region20: #{tpu_custom_call.1} parent=1 // pred_region
      %34 = dma.done [#allocation4], 512
    $region21: #{tpu_custom_call.1} parent=1 // pred_fallthru
      _
    %v35 = vld [vmem:[%s0] sm:$0xff]
    %v36 = vld [vmem:[%s0 + $0x8] sm:$0xff]
    %v37 = vld [vmem:[%s0 + $0x10] sm:$0xff]
    %v38 = vld [vmem:[%s0 + $0x18] sm:$0xff]
    %v39 = vld [vmem:[#allocation3] sm:$0xff]
    %v40 = vld [vmem:[#allocation3 + $0x8] sm:$0xff]
    %v41 = vld [vmem:[#allocation3 + $0x10] sm:$0xff]
    %v42 = vld [vmem:[#allocation3 + $0x18] sm:$0xff]
    %v43 = vmul.f32 %v35, %v39
    %v44 = vmul.f32 %v36, %v40
    %v45 = vmul.f32 %v37, %v41
    %v46 = vmul.f32 %v38, %v42
    %v47 = vld [vmem:[%s2] sm:$0xff]
    %v48 = vld [vmem:[%s2 + $0x8] sm:$0xff]
    %v49 = vld [vmem:[%s2 + $0x10] sm:$0xff]
    %v50 = vld [vmem:[%s2 + $0x18] sm:$0xff]
    %52 = vset.pattern.permute.xlu0 0
    %53 = vperm.xlu0 %52, %v47
    %v54 = vpop.permute.xlu0 %53
    %57 = vset.pattern.permute.xlu0 0
    %58 = vperm.xlu0 %57, %v48
    %v59 = vpop.permute.xlu0 %58
    %62 = vset.pattern.permute.xlu0 0
    %63 = vperm.xlu0 %62, %v49
    %v64 = vpop.permute.xlu0 %63
    %67 = vset.pattern.permute.xlu0 0
    %68 = vperm.xlu0 %67, %v50
    %v69 = vpop.permute.xlu0 %68
    %v71 = vmul.f32 %v43, %v54
    %v72 = vmul.f32 %v44, %v59
    %v73 = vmul.f32 %v45, %v64
    %v74 = vmul.f32 %v46, %v69
    %v75 = vadd.f32 %v71, %v72
    %v76 = vadd.f32 %v75, %v73
    %v77 = vadd.f32 %v76, %v74
    %v78 = vrot.slane %v77, 4
    %v79 = vadd.f32 %v77, %v78
    %v80 = vrot.slane %v79, 2
    %v81 = vadd.f32 %v79, %v80
    %v82 = vrot.slane %v81, 1
    %v83 = vadd.f32 %v81, %v82
    %s84 = sld [smem:[#allocation2]]
    %v85 = vstv %s84
    %v86 = vadd.f32 %v83, %v85
    %v87 = vxor.u32 %v86, 2147483648
    %v88 = vmul.f32 %v87, 1.442695
    %v89 = vpow.pop %v88
    %v90 = vadd.f32 %v89, 1.0
    %v91 = vrcp.pop %v90
    %v92 = vmul.f32 %v90, %v91
    %v93 = vsub.f32 1.0, %v92
    %v94 = vmul.f32 %v91, %v93
    %v95 = vadd.f32 %v91, %v94
    %vm96 = vweird.f32 %v90
    %vm97 = vweird.f32 %v91
    %vm98 = vmor %vm96, %vm97
    %v99 = vsel %vm98, %v91, %v95
    %v100 = vand.u32 2147483647, %v90
    %vm101 = vcmp.eq.f32.partialorder %v100, 8.507059e+37
    %v102 = vand.u32 %v90, 2147483648
    %v103 = vor.u32 1.1754944e-38, %v102
    %v104 = vsel %vm101, %v103, %v99
    %v105 = vmul.f32 1.0, %v104
    %106 = vst [vmem:[#allocation6] sm:$0x1] %v105
    // Predicated region
    $region22: #{tpu_custom_call.1} parent=1 // pred_check
      _
    $region23: #{tpu_custom_call.1} parent=1 // pred_check_branch
      %108 = sbr.rel (0) target = $region25
    $region24: #{tpu_custom_call.1} parent=1 // pred_region
      %110 = vsyncadd [#allocation5], 0
      %s112 = sshll.u32 [#allocation6], 4
      %s113 = int_to_ptr.vmem [resolvable:$true] %s112
      %s114 = sshll.u32 %s4, 4
      %s115 = int_to_ptr.hbm [resolvable:$true] %s114
      %117 = dma.vmem_to_hbm [thread:$0]  %s113, 16, %s115, [#allocation5]
    $region25: #{tpu_custom_call.1} parent=1 // pred_fallthru
      _
    // Predicated region
    $region26: #{tpu_custom_call.1} parent=1 // pred_check
      _
    $region27: #{tpu_custom_call.1} parent=1 // pred_check_branch
      %119 = sbr.rel (0) target = $region29
    $region28: #{tpu_custom_call.1} parent=1 // pred_region
      %121 = dma.done [#allocation5], 16
    $region29: #{tpu_custom_call.1} parent=1 // pred_fallthru
      _
    %122 = vsyncpa [#allocation4], 1
    %123 = vsyncpa [#allocation5], 1

</llo_original>
